<compile_context>
chip_gen: v7x
topology: tpu7x:2x2x1
jax: 0.10.0
libtpu: 0.0.40
codegen_flags: <defaults>
</compile_context>

<pallas_src>
import jax
import jax.numpy as jnp
from jax import lax
from jax.experimental import pallas as pl
from jax.experimental.pallas import tpu as pltpu

# ----- model config (mirrors args in __init__) -----
B, C_IN, H, W = 2, 4, 16, 16          # images: [2, 4, 16, 16]
HW = H * W
C_FEAT = 32                            # classifier_in_features stand-in
NUM_CLASSES = 10                       # args.num_classes
GEM_P = 3.0                            # args.gem_p
GEM_EPS = 1e-6
DROPOUT_P = 0.1                        # args.dropout
N_DROPOUT = 5                          # multi-sample dropout count
KH = KW = 3
K_RAW = C_IN * KH * KW                 # 36
K_SUB = 40                             # contraction dim padded only to the sublane multiple (8)
N_PAD = 128                            # classifier output padded to lane width

# p=3 is specialized at trace time (x*x*x on VPU); set to None to use the learnable runtime p (SMEM).
STATIC_GEM_P = GEM_P


# ---------------- fused Pallas kernel (one invocation = whole batch) ----------------

def make_fused_kernel(static_p, batch):
    """Builds the fused forward kernel.  If static_p is None, the kernel takes a leading SMEM scalar
       ref carrying the learnable GeM exponent; otherwise p is baked in at trace time."""

    def body(p_val, inv_p, patches_ref, wconv_ref, bconv_ref, linw_ref, linb_ref, out_ref):
        # patches_ref: [K_SUB, B*HW]   im2col columns for the whole batch (K zero-padded to 40)
        # wconv_ref:   [C_FEAT, K_SUB]
        # bconv_ref:   [C_FEAT, 1]
        # linw_ref:    [B, C_FEAT, N_PAD]  per-image effective linear weight (dropout mask folded in)
        # linb_ref:    [1, N_PAD]
        # out_ref:     [B, N_PAD]

        # --- backbone stand-in: one batched MXU matmul + bias + ReLU, lane-dense [C_FEAT, B*HW] ---
        conv = jnp.dot(wconv_ref[...], patches_ref[...], preferred_element_type=jnp.float32)
        conv = jnp.maximum(conv + bconv_ref[...], 0.0)               # [C_FEAT, B*HW]

        rows = []
        for b in range(batch):                                       # unrolled (B=2); keeps xp per-image
            x_b = jnp.maximum(conv[:, b * HW:(b + 1) * HW], GEM_EPS)  # [C_FEAT, HW] static lane slice
            # --- GeM pooling: clamp(eps).pow(p) -> spatial mean -> pow(1/p) ---
            if static_p is not None and float(static_p) == 3.0:
                xp_b = x_b * x_b * x_b                                # VPU only (no EUP transcendentals)
            else:
                xp_b = jnp.power(x_b, p_val)                          # EUP: exp(p*log(x))
            pooled = jnp.mean(xp_b, axis=-1, keepdims=True)           # [C_FEAT, 1]
            gem = jnp.power(pooled, inv_p)                            # [C_FEAT, 1]
            # --- classifier (dropout already folded into linw): MXU contraction over C_FEAT ---
            logits = lax.dot_general(
                gem, linw_ref[b],
                dimension_numbers=(((0,), (0,)), ((), ())),
                preferred_element_type=jnp.float32)                   # [1, N_PAD]
            rows.append(logits + linb_ref[...])
        out_ref[...] = jnp.concatenate(rows, axis=0)                  # single lane-dense [B, N_PAD] store

    if static_p is not None:
        def kernel(patches_ref, wconv_ref, bconv_ref, linw_ref, linb_ref, out_ref):
            body(float(static_p), 1.0 / float(static_p),
                 patches_ref, wconv_ref, bconv_ref, linw_ref, linb_ref, out_ref)
    else:
        def kernel(p_ref, patches_ref, wconv_ref, bconv_ref, linw_ref, linb_ref, out_ref):
            p = p_ref[0]
            body(p, 1.0 / p,
                 patches_ref, wconv_ref, bconv_ref, linw_ref, linb_ref, out_ref)
    return kernel


# ---------------- JAX wrapper (glue) ----------------

def _im2col_3x3_same_T(x_nchw):
    """NCHW -> [K_SUB, B*H*W] patches (rows = C_in*9 zero-padded to 40, columns ordered (b,h,w))."""
    b, c, h, w = x_nchw.shape
    xp = jnp.pad(x_nchw, ((0, 0), (0, 0), (1, 1), (1, 1)))
    cols = [xp[:, :, i:i + h, j:j + w] for i in range(KH) for j in range(KW)]
    patches = jnp.stack(cols, axis=2)                  # [B, C_in, 9, H, W]
    patches = patches.transpose(1, 2, 0, 3, 4)         # [C_in, 9, B, H, W]
    patches = patches.reshape(c * KH * KW, b * h * w)  # [36, B*HW]
    return jnp.pad(patches, ((0, K_SUB - c * KH * KW), (0, 0)))


def prepare_params(params):
    """One-time parameter prep (transposes / padding hoisted out of the forward)."""
    w_conv = jnp.pad(params["conv_w"].reshape(C_FEAT, K_RAW),
                     ((0, 0), (0, K_SUB - K_RAW)))                          # [C_FEAT, K_SUB]
    lin_w = jnp.pad(params["lin_w"].T, ((0, 0), (0, N_PAD - NUM_CLASSES)))  # [C_FEAT, N_PAD]
    lin_b = jnp.pad(params["lin_b"], (0, N_PAD - NUM_CLASSES)).reshape(1, N_PAD)
    return {
        "gem_p": params["gem_p"],                       # [1] (only read when STATIC_GEM_P is None)
        "conv_w": w_conv,
        "conv_b": params["conv_b"].reshape(C_FEAT, 1),  # [C_FEAT, 1]
        "lin_w": lin_w,
        "lin_b": lin_b,
    }


def custom_model_resnet_forward(images, prep, dropout_masks):
    """Forward pass (training=True path, aux_loss_features=None). Single fused pallas_call, no grid."""
    b = images.shape[0]
    patches_t = _im2col_3x3_same_T(images)                          # [K_SUB, B*HW]

    # multi-sample dropout folded (by linearity) into a per-image effective linear weight: 32 KiB total
    mean_mask = jnp.mean(dropout_masks, axis=0)                     # [B, C_FEAT]
    lin_w_eff = prep["lin_w"][None, :, :] * mean_mask[:, :, None]   # [B, C_FEAT, N_PAD]

    kernel = make_fused_kernel(STATIC_GEM_P, b)
    vmem = pl.BlockSpec(memory_space=pltpu.MemorySpace.VMEM)

    args = [patches_t, prep["conv_w"], prep["conv_b"], lin_w_eff, prep["lin_b"]]
    in_specs = [vmem, vmem, vmem, vmem, vmem]
    if STATIC_GEM_P is None:
        args = [prep["gem_p"]] + args
        in_specs = [pl.BlockSpec(memory_space=pltpu.MemorySpace.SMEM)] + in_specs

    out = pl.pallas_call(
        kernel,
        out_shape=jax.ShapeDtypeStruct((b, N_PAD), jnp.float32),
        in_specs=in_specs,
        out_specs=pl.BlockSpec(memory_space=pltpu.MemorySpace.VMEM),
    )(*args)

    return out[:, :NUM_CLASSES]


# ---------------- pure-JAX reference (for validation) ----------------

def reference_forward(images, params, dropout_masks):
    feat = jax.lax.conv_general_dilated(
        images, params["conv_w"], window_strides=(1, 1), padding="SAME",
        dimension_numbers=("NCHW", "OIHW", "NCHW"))
    feat = jnp.maximum(feat + params["conv_b"][None, :, None, None], 0.0)
    p = params["gem_p"][0]
    gem = jnp.mean(jnp.power(jnp.maximum(feat, GEM_EPS), p), axis=(2, 3)) ** (1.0 / p)
    outs = 0.0
    for i in range(N_DROPOUT):
        outs = outs + (gem * dropout_masks[i]) @ params["lin_w"].T + params["lin_b"]
    return outs / N_DROPOUT


# ---------------- main ----------------

if __name__ == "__main__":
    key = jax.random.PRNGKey(0)
    k_img, k_cw, k_cb, k_lw, k_lb, k_drop = jax.random.split(key, 6)

    images = jax.random.normal(k_img, (B, C_IN, H, W), dtype=jnp.float32)

    params = {
        # synthetic backbone stem (stand-in for timm ResNet features)
        "conv_w": 0.1 * jax.random.normal(k_cw, (C_FEAT, C_IN, KH, KW), dtype=jnp.float32),
        "conv_b": 0.05 * jax.random.normal(k_cb, (C_FEAT,), dtype=jnp.float32),
        # GeM(p=args.gem_p): nn.Parameter(torch.ones(1) * p)
        "gem_p": jnp.full((1,), GEM_P, dtype=jnp.float32),
        # linear_main: Linear(classifier_in_features, num_classes)
        "lin_w": 0.1 * jax.random.normal(k_lw, (NUM_CLASSES, C_FEAT), dtype=jnp.float32),
        "lin_b": 0.05 * jax.random.normal(k_lb, (NUM_CLASSES,), dtype=jnp.float32),
    }

    # multi-sample dropout masks, pre-scaled by 1/(1-p) (inverted dropout)
    keep = jax.random.bernoulli(k_drop, 1.0 - DROPOUT_P, (N_DROPOUT, B, C_FEAT))
    dropout_masks = keep.astype(jnp.float32) / (1.0 - DROPOUT_P)

    prep = prepare_params(params)                      # one-time weight layout prep
    fwd = jax.jit(custom_model_resnet_forward)

    out = fwd(images, prep, dropout_masks)
    out = jax.block_until_ready(out)

    ref = reference_forward(images, params, dropout_masks)
    assert out.shape == (B, NUM_CLASSES)
    assert jnp.allclose(out, ref, rtol=1e-3, atol=1e-3), "Pallas output mismatch vs JAX reference"

    print("KERNEL_OK")
</pallas_src>

<mosaic_0001>
module attributes {stable_mosaic.version = 11 : i64} {
  func.func @kernel(%arg0: memref<40x512xf32, #tpu.memory_space<vmem>>, %arg1: memref<32x40xf32, #tpu.memory_space<vmem>>, %arg2: memref<32x1xf32, #tpu.memory_space<vmem>>, %arg3: memref<2x32x128xf32, #tpu.memory_space<vmem>>, %arg4: memref<1x128xf32, #tpu.memory_space<vmem>>, %arg5: memref<2x128xf32, #tpu.memory_space<vmem>>) attributes {dimension_semantics = [], scalar_prefetch = 0 : i64, scratch_operands = 0 : i64, tpu.core_type = #tpu.core_type<tc>} {
    %c0 = arith.constant 0 : index
    %c0_0 = arith.constant 0 : index
    %0 = vector.load %arg1[%c0, %c0_0] : memref<32x40xf32, #tpu.memory_space<vmem>>, vector<32x40xf32>
    %c0_1 = arith.constant 0 : index
    %c0_2 = arith.constant 0 : index
    %1 = vector.load %arg0[%c0_1, %c0_2] : memref<40x512xf32, #tpu.memory_space<vmem>>, vector<40x512xf32>
    %cst = arith.constant dense<0.000000e+00> : vector<32x512xf32>
    %2 = tpu.matmul %0, %1, %cst {dimension_numbers = #tpu.dot_dimension_numbers<[1], [0], [0], [1], [0, 0, 1, 1], [], []>} : vector<32x40xf32>, vector<40x512xf32>, vector<32x512xf32> -> vector<32x512xf32>
    %c0_3 = arith.constant 0 : index
    %c0_4 = arith.constant 0 : index
    %3 = vector.load %arg2[%c0_3, %c0_4] : memref<32x1xf32, #tpu.memory_space<vmem>>, vector<32x1xf32>
    %4 = vector.broadcast %3 : vector<32x1xf32> to vector<32x512xf32>
    %5 = arith.addf %2, %4 : vector<32x512xf32>
    %cst_5 = arith.constant 0.000000e+00 : f32
    %6 = vector.broadcast %cst_5 : f32 to vector<32x512xf32>
    %7 = arith.maximumf %5, %6 : vector<32x512xf32>
    %8 = vector.extract_strided_slice %7 {offsets = [0, 0], sizes = [32, 256], strides = [1, 1]} : vector<32x512xf32> to vector<32x256xf32>
    %cst_6 = arith.constant 9.99999997E-7 : f32
    %9 = vector.broadcast %cst_6 : f32 to vector<32x256xf32>
    %10 = arith.maximumf %8, %9 : vector<32x256xf32>
    %11 = arith.mulf %10, %10 : vector<32x256xf32>
    %12 = arith.mulf %11, %10 : vector<32x256xf32>
    %cst_7 = arith.constant dense<0.000000e+00> : vector<32xf32>
    %13 = vector.multi_reduction <add>, %12, %cst_7 [1] : vector<32x256xf32> to vector<32xf32>
    %14 = vector.shape_cast %13 : vector<32xf32> to vector<32x1xf32>
    %cst_8 = arith.constant 2.560000e+02 : f32
    %15 = vector.broadcast %cst_8 : f32 to vector<32x1xf32>
    %16 = arith.divf %14, %15 : vector<32x1xf32>
    %cst_9 = arith.constant 0.333333343 : f32
    %17 = vector.broadcast %cst_9 : f32 to vector<32x1xf32>
    %18 = math.powf %16, %17 : vector<32x1xf32>
    %c0_10 = arith.constant 0 : index
    %c0_11 = arith.constant 0 : index
    %c0_12 = arith.constant 0 : index
    %19 = vector.load %arg3[%c0_10, %c0_11, %c0_12] : memref<2x32x128xf32, #tpu.memory_space<vmem>>, vector<1x32x128xf32>
    %20 = vector.shape_cast %19 : vector<1x32x128xf32> to vector<32x128xf32>
    %cst_13 = arith.constant dense<0.000000e+00> : vector<1x128xf32>
    %21 = tpu.matmul %18, %20, %cst_13 {dimension_numbers = #tpu.dot_dimension_numbers<[0], [0], [1], [1], [0, 1, 1, 1], [], []>} : vector<32x1xf32>, vector<32x128xf32>, vector<1x128xf32> -> vector<1x128xf32>
    %c0_14 = arith.constant 0 : index
    %c0_15 = arith.constant 0 : index
    %22 = vector.load %arg4[%c0_14, %c0_15] : memref<1x128xf32, #tpu.memory_space<vmem>>, vector<1x128xf32>
    %23 = arith.addf %21, %22 : vector<1x128xf32>
    %24 = vector.extract_strided_slice %7 {offsets = [0, 256], sizes = [32, 256], strides = [1, 1]} : vector<32x512xf32> to vector<32x256xf32>
    %cst_16 = arith.constant 9.99999997E-7 : f32
    %25 = vector.broadcast %cst_16 : f32 to vector<32x256xf32>
    %26 = arith.maximumf %24, %25 : vector<32x256xf32>
    %27 = arith.mulf %26, %26 : vector<32x256xf32>
    %28 = arith.mulf %27, %26 : vector<32x256xf32>
    %cst_17 = arith.constant dense<0.000000e+00> : vector<32xf32>
    %29 = vector.multi_reduction <add>, %28, %cst_17 [1] : vector<32x256xf32> to vector<32xf32>
    %30 = vector.shape_cast %29 : vector<32xf32> to vector<32x1xf32>
    %cst_18 = arith.constant 2.560000e+02 : f32
    %31 = vector.broadcast %cst_18 : f32 to vector<32x1xf32>
    %32 = arith.divf %30, %31 : vector<32x1xf32>
    %cst_19 = arith.constant 0.333333343 : f32
    %33 = vector.broadcast %cst_19 : f32 to vector<32x1xf32>
    %34 = math.powf %32, %33 : vector<32x1xf32>
    %c1 = arith.constant 1 : index
    %c0_20 = arith.constant 0 : index
    %c0_21 = arith.constant 0 : index
    %35 = vector.load %arg3[%c1, %c0_20, %c0_21] : memref<2x32x128xf32, #tpu.memory_space<vmem>>, vector<1x32x128xf32>
    %36 = vector.shape_cast %35 : vector<1x32x128xf32> to vector<32x128xf32>
    %cst_22 = arith.constant dense<0.000000e+00> : vector<1x128xf32>
    %37 = tpu.matmul %34, %36, %cst_22 {dimension_numbers = #tpu.dot_dimension_numbers<[0], [0], [1], [1], [0, 1, 1, 1], [], []>} : vector<32x1xf32>, vector<32x128xf32>, vector<1x128xf32> -> vector<1x128xf32>
    %c0_23 = arith.constant 0 : index
    %c0_24 = arith.constant 0 : index
    %38 = vector.load %arg4[%c0_23, %c0_24] : memref<1x128xf32, #tpu.memory_space<vmem>>, vector<1x128xf32>
    %39 = arith.addf %37, %38 : vector<1x128xf32>
    %40 = tpu.concatenate %23, %39 in 0 : vector<1x128xf32>, vector<1x128xf32> -> vector<2x128xf32>
    %c0_25 = arith.constant 0 : index
    %c0_26 = arith.constant 0 : index
    %41 = vector.load %arg5[%c0_25, %c0_26] : memref<2x128xf32, #tpu.memory_space<vmem>>, vector<2x128xf32>
    tpu.vector_store %arg5[%c0_25, %c0_26], %40 {strides = array<i32>} : memref<2x128xf32, #tpu.memory_space<vmem>>, vector<2x128xf32>,
    return
  }
}

</mosaic_0001>

<llo_original>
// kernel: custom_model_resnet_forward.1
$region0: #{custom_model_resnet_forward.1}
  #allocation0 [shape = 'u32[]', space=smem, size = 0x4, offset = 0x4, fixed_abs, tag = 'smem constant byte address 0x4 - core index']
  #allocation1 [shape = 'u32[144,128]{1,0:T(1,128)}', space=vmem, size = 0x12000, scoped, tag = 'internal scratch']
  %s0 = inlined_call_operand.vmem [shape: f32[40,512], index: 0, kind: input, shape index: {}]
  %s1 = inlined_call_operand.vmem [shape: f32[32,40], index: 1, kind: input, shape index: {}]
  %s2 = inlined_call_operand.vmem [shape: f32[32,1], index: 2, kind: input, shape index: {}]
  %s3 = inlined_call_operand.vmem [shape: f32[2,32,128], index: 3, kind: input, shape index: {}]
  %s4 = inlined_call_operand.vmem [shape: f32[1,128], index: 4, kind: input, shape index: {}]
  %s5 = inlined_call_operand.hbm [shape: f32[2,128], index: 5, kind: output, shape index: {}]
  %s6 = sld [smem:[#allocation0]]
  $region30: #{custom_model_resnet_forward.1} parent=0
    _
  %s8 = ssub.s32 1, %s6
  %s9 = scalar_select 0, %s8, %s6
  $region1: #{custom_model_resnet_forward.1} parent=0
    #allocation2 [shape = 'u8[1024]{0}', space=vmem, size = 0x400, scoped, tag = 'output window, operand 0, single buffered']
    #allocation3 [shape = 's32[1]{0}', space=sflag, size = 0x4, scoped, tag = 'scoped memory for custom_model_resnet_forward.1']
    %10 = vsyncpa [#allocation3], 0
    // Predicated region
    $region2: #{custom_model_resnet_forward.1} parent=1 // pred_check
      _
    $region3: #{custom_model_resnet_forward.1} parent=1 // pred_check_branch
      %12 = sbr.rel (0) target = $region5
    $region4: #{custom_model_resnet_forward.1} parent=1 // pred_region
      _
    $region5: #{custom_model_resnet_forward.1} parent=1 // pred_fallthru
      _
    // Predicated region
    $region6: #{custom_model_resnet_forward.1} parent=1 // pred_check
      _
    $region7: #{custom_model_resnet_forward.1} parent=1 // pred_check_branch
      %14 = sbr.rel (0) target = $region9
    $region8: #{custom_model_resnet_forward.1} parent=1 // pred_region
      _
    $region9: #{custom_model_resnet_forward.1} parent=1 // pred_fallthru
      _
    // Predicated region
    $region10: #{custom_model_resnet_forward.1} parent=1 // pred_check
      _
    $region11: #{custom_model_resnet_forward.1} parent=1 // pred_check_branch
      %16 = sbr.rel (0) target = $region13
    $region12: #{custom_model_resnet_forward.1} parent=1 // pred_region
      _
    $region13: #{custom_model_resnet_forward.1} parent=1 // pred_fallthru
      _
    // Predicated region
    $region14: #{custom_model_resnet_forward.1} parent=1 // pred_check
      _
    $region15: #{custom_model_resnet_forward.1} parent=1 // pred_check_branch
      %18 = sbr.rel (0) target = $region17
    $region16: #{custom_model_resnet_forward.1} parent=1 // pred_region
      _
    $region17: #{custom_model_resnet_forward.1} parent=1 // pred_fallthru
      _
    // Predicated region
    $region18: #{custom_model_resnet_forward.1} parent=1 // pred_check
      _
    $region19: #{custom_model_resnet_forward.1} parent=1 // pred_check_branch
      %20 = sbr.rel (0) target = $region21
    $region20: #{custom_model_resnet_forward.1} parent=1 // pred_region
      _
    $region21: #{custom_model_resnet_forward.1} parent=1 // pred_fallthru
      _
    %v21 = vld [vmem:[%s1] sm:$0xff]
    %v22 = vld [vmem:[%s1 + $0x8] sm:$0xff]
    %v23 = vld [vmem:[%s1 + $0x10] sm:$0xff]
    %v24 = vld [vmem:[%s1 + $0x18] sm:$0xff]
    %v25 = vld [vmem:[%s0] sm:$0xff]
    %v26 = vld [vmem:[%s0 + $0x8] sm:$0xff]
    %v27 = vld [vmem:[%s0 + $0x10] sm:$0xff]
    %v28 = vld [vmem:[%s0 + $0x18] sm:$0xff]
    %v29 = vld [vmem:[%s0 + $0x20] sm:$0xff]
    %v30 = vld [vmem:[%s0 + $0x28] sm:$0xff]
    %v31 = vld [vmem:[%s0 + $0x30] sm:$0xff]
    %v32 = vld [vmem:[%s0 + $0x38] sm:$0xff]
    %v33 = vld [vmem:[%s0 + $0x40] sm:$0xff]
    %v34 = vld [vmem:[%s0 + $0x48] sm:$0xff]
    %v35 = vld [vmem:[%s0 + $0x50] sm:$0xff]
    %v36 = vld [vmem:[%s0 + $0x58] sm:$0xff]
    %v37 = vld [vmem:[%s0 + $0x60] sm:$0xff]
    %v38 = vld [vmem:[%s0 + $0x68] sm:$0xff]
    %v39 = vld [vmem:[%s0 + $0x70] sm:$0xff]
    %v40 = vld [vmem:[%s0 + $0x78] sm:$0xff]
    %v41 = vld [vmem:[%s0 + $0x80] sm:$0xff]
    %v42 = vld [vmem:[%s0 + $0x88] sm:$0xff]
    %v43 = vld [vmem:[%s0 + $0x90] sm:$0xff]
    %v44 = vld [vmem:[%s0 + $0x98] sm:$0xff]
    %v45 = vld [vmem:[%s2] sm:$0xff]
    %v46 = vld [vmem:[%s2 + $0x8] sm:$0xff]
    %v47 = vld [vmem:[%s2 + $0x10] sm:$0xff]
    %v48 = vld [vmem:[%s2 + $0x18] sm:$0xff]
    %50 = vset.pattern.permute.xlu0 0
    %51 = vperm.xlu0 %50, %v45
    %v52 = vpop.permute.xlu0 %51
    %55 = vset.pattern.permute.xlu0 0
    %56 = vperm.xlu0 %55, %v46
    %v57 = vpop.permute.xlu0 %56
    %60 = vset.pattern.permute.xlu0 0
    %61 = vperm.xlu0 %60, %v47
    %v62 = vpop.permute.xlu0 %61
    %65 = vset.pattern.permute.xlu0 0
    %66 = vperm.xlu0 %65, %v48
    %v67 = vpop.permute.xlu0 %66
    %vm69 = vcmask 326656
    %v71 = vsel %vm69, %v21, 0
    %v74 = vsel %vm69, %v22, 0
    %v77 = vsel %vm69, %v23, 0
    %v80 = vsel %vm69, %v24, 0
    %82 = vmatprep.subr.mxu0 %v26
    %83 = vmatpush1.msra.mxu0 %v25
    %84 = vmatprep.subr.mxu0 %v30
    %85 = vmatpush1.msra.mxu0 %v29
    %86 = vmatprep.subr.mxu0 %v34
    %87 = vmatpush1.msra.mxu0 %v33
    %88 = vmatprep.subr.mxu0 %v38
    %89 = vmatpush1.msra.mxu0 %v37
    %90 = vmatprep.subr.mxu0 %v42
    %91 = vmatpush1.msra.mxu0 %v41
    %92 = vmatprep.subr.mxu0 0.0
    %93 = vmatpush1.msra.mxu0 0.0
    %94 = vmatprep.subr.mxu0 0.0
    %95 = vmatpush1.msra.mxu0 0.0
    %96 = vmatprep.subr.mxu0 0.0
    %97 = vmatpush1.msra.mxu0 0.0
    %98 = vmatprep.subr.mxu0 0.0
    %99 = vmatpush1.msra.mxu0 0.0
    %100 = vmatprep.subr.mxu0 0.0
    %101 = vmatpush1.msra.mxu0 0.0
    %102 = vmatprep.subr.mxu0 0.0
    %103 = vmatpush1.msra.mxu0 0.0
    %104 = vmatprep.subr.mxu0 0.0
    %105 = vmatpush1.msra.mxu0 0.0
    %106 = vmatprep.subr.mxu0 0.0
    %107 = vmatpush1.msra.mxu0 0.0
    %108 = vmatprep.subr.mxu0 0.0
    %109 = vmatpush1.msra.mxu0 0.0
    %110 = vmatprep.subr.mxu0 0.0
    %111 = vmatpush1.msra.mxu0 0.0
    %112 = vmatprep.subr.mxu0 0.0
    %113 = vmatpush1.msra.mxu0 0.0
    %114 = vmatprep.subr.mxu0 0.0
    %115 = vmatpush1.msra.mxu0 0.0
    %116 = vmatprep.subr.mxu0 0.0
    %117 = vmatpush1.msra.mxu0 0.0
    %118 = vmatprep.subr.mxu0 0.0
    %119 = vmatpush1.msra.mxu0 0.0
    %120 = vmatprep.subr.mxu0 0.0
    %121 = vmatpush1.msra.mxu0 0.0
    %122 = vmatprep.subr.mxu0 0.0
    %123 = vmatpush1.msra.mxu0 0.0
    %124 = vmatprep.subr.mxu0 0.0
    %125 = vmatpush1.msra.mxu0 0.0
    %126 = vmatprep.subr.mxu0 0.0
    %127 = vmatpush1.msra.mxu0 0.0
    %128 = vmatprep.subr.mxu0 0.0
    %129 = vmatpush1.msra.mxu0 0.0
    %130 = vmatprep.subr.mxu0 0.0
    %131 = vmatpush1.msra.mxu0 0.0
    %132 = vmatprep.subr.mxu0 0.0
    %133 = vmatpush1.msra.mxu0 0.0
    %134 = vmatprep.subr.mxu0 0.0
    %135 = vmatpush1.msra.mxu0 0.0
    %136 = vmatprep.subr.mxu0 0.0
    %137 = vmatpush1.msra.mxu0 0.0
    %138 = vmatprep.subr.mxu0 0.0
    %139 = vmatpush1.msra.mxu0 0.0
    %140 = vmatprep.subr.mxu0 0.0
    %141 = vmatpush1.msra.mxu0 0.0
    %142 = vmatprep.subr.mxu0 0.0
    %143 = vmatpush1.msra.mxu0 0.0
    %144 = vmatprep.subr.mxu0 0.0
    %145 = vmatpush1.msra.mxu0 0.0
    %146 = vmatprep.mubr.f32.mxu0 0.0
    %147 = vmatmul.mubr.f32.gmra.mrb[0].mxu0 %v71
    %v148 = vpop.f32.mrb[0].mxu0
    %v149 = vadd.f32 %v52, %v148
    %v150 = vpop.f32.mrb[0].mxu0
    %v151 = vadd.f32 %v52, %v150
    %152 = vmatprep.mubr.f32.mxu0 0.0
    %153 = vmatmul.mubr.f32.gmra.mrb[0].mxu0 %v74
    %v154 = vpop.f32.mrb[0].mxu0
    %v155 = vadd.f32 %v57, %v154
    %v156 = vpop.f32.mrb[0].mxu0
    %v157 = vadd.f32 %v57, %v156
    %158 = vmatprep.mubr.f32.mxu0 0.0
    %159 = vmatmul.mubr.f32.gmra.mrb[0].mxu0 %v77
    %v160 = vpop.f32.mrb[0].mxu0
    %v161 = vadd.f32 %v62, %v160
    %v162 = vpop.f32.mrb[0].mxu0
    %v163 = vadd.f32 %v62, %v162
    %164 = vmatprep.mubr.f32.mxu0 0.0
    %165 = vmatmul.mubr.f32.gmra.mrb[0].mxu0 %v80
    %v166 = vpop.f32.mrb[0].mxu0
    %v167 = vadd.f32 %v67, %v166
    %v168 = vpop.f32.mrb[0].mxu0
    %v169 = vadd.f32 %v67, %v168
    %170 = vdwg.mxu0
    %171 = vmatprep.subr.mxu0 %v28
    %172 = vmatpush1.msra.mxu0 %v27
    %173 = vmatprep.subr.mxu0 %v32
    %174 = vmatpush1.msra.mxu0 %v31
    %175 = vmatprep.subr.mxu0 %v36
    %176 = vmatpush1.msra.mxu0 %v35
    %177 = vmatprep.subr.mxu0 %v40
    %178 = vmatpush1.msra.mxu0 %v39
    %179 = vmatprep.subr.mxu0 %v44
    %180 = vmatpush1.msra.mxu0 %v43
    %181 = vmatprep.subr.mxu0 0.0
    %182 = vmatpush1.msra.mxu0 0.0
    %183 = vmatprep.subr.mxu0 0.0
    %184 = vmatpush1.msra.mxu0 0.0
    %185 = vmatprep.subr.mxu0 0.0
    %186 = vmatpush1.msra.mxu0 0.0
    %187 = vmatprep.subr.mxu0 0.0
    %188 = vmatpush1.msra.mxu0 0.0
    %189 = vmatprep.subr.mxu0 0.0
    %190 = vmatpush1.msra.mxu0 0.0
    %191 = vmatprep.subr.mxu0 0.0
    %192 = vmatpush1.msra.mxu0 0.0
    %193 = vmatprep.subr.mxu0 0.0
    %194 = vmatpush1.msra.mxu0 0.0
    %195 = vmatprep.subr.mxu0 0.0
    %196 = vmatpush1.msra.mxu0 0.0
    %197 = vmatprep.subr.mxu0 0.0
    %198 = vmatpush1.msra.mxu0 0.0
    %199 = vmatprep.subr.mxu0 0.0
    %200 = vmatpush1.msra.mxu0 0.0
    %201 = vmatprep.subr.mxu0 0.0
    %202 = vmatpush1.msra.mxu0 0.0
    %203 = vmatprep.subr.mxu0 0.0
    %204 = vmatpush1.msra.mxu0 0.0
    %205 = vmatprep.subr.mxu0 0.0
    %206 = vmatpush1.msra.mxu0 0.0
    %207 = vmatprep.subr.mxu0 0.0
    %208 = vmatpush1.msra.mxu0 0.0
    %209 = vmatprep.subr.mxu0 0.0
    %210 = vmatpush1.msra.mxu0 0.0
    %211 = vmatprep.subr.mxu0 0.0
    %212 = vmatpush1.msra.mxu0 0.0
    %213 = vmatprep.subr.mxu0 0.0
    %214 = vmatpush1.msra.mxu0 0.0
    %215 = vmatprep.subr.mxu0 0.0
    %216 = vmatpush1.msra.mxu0 0.0
    %217 = vmatprep.subr.mxu0 0.0
    %218 = vmatpush1.msra.mxu0 0.0
    %219 = vmatprep.subr.mxu0 0.0
    %220 = vmatpush1.msra.mxu0 0.0
    %221 = vmatprep.subr.mxu0 0.0
    %222 = vmatpush1.msra.mxu0 0.0
    %223 = vmatprep.subr.mxu0 0.0
    %224 = vmatpush1.msra.mxu0 0.0
    %225 = vmatprep.subr.mxu0 0.0
    %226 = vmatpush1.msra.mxu0 0.0
    %227 = vmatprep.subr.mxu0 0.0
    %228 = vmatpush1.msra.mxu0 0.0
    %229 = vmatprep.subr.mxu0 0.0
    %230 = vmatpush1.msra.mxu0 0.0
    %231 = vmatprep.subr.mxu0 0.0
    %232 = vmatpush1.msra.mxu0 0.0
    %233 = vmatprep.subr.mxu0 0.0
    %234 = vmatpush1.msra.mxu0 0.0
    %235 = vmatprep.mubr.f32.mxu0 0.0
    %236 = vmatmul.mubr.f32.gmra.mrb[0].mxu0 %v71
    %v237 = vpop.f32.mrb[0].mxu0
    %v238 = vadd.f32 %v52, %v237
    %v239 = vpop.f32.mrb[0].mxu0
    %v240 = vadd.f32 %v52, %v239
    %241 = vmatprep.mubr.f32.mxu0 0.0
    %242 = vmatmul.mubr.f32.gmra.mrb[0].mxu0 %v74
    %v243 = vpop.f32.mrb[0].mxu0
    %v244 = vadd.f32 %v57, %v243
    %v245 = vpop.f32.mrb[0].mxu0
    %v246 = vadd.f32 %v57, %v245
    %247 = vmatprep.mubr.f32.mxu0 0.0
    %248 = vmatmul.mubr.f32.gmra.mrb[0].mxu0 %v77
    %v249 = vpop.f32.mrb[0].mxu0
    %v250 = vadd.f32 %v62, %v249
    %v251 = vpop.f32.mrb[0].mxu0
    %v252 = vadd.f32 %v62, %v251
    %253 = vmatprep.mubr.f32.mxu0 0.0
    %254 = vmatmul.mubr.f32.gmra.mrb[0].mxu0 %v80
    %v255 = vpop.f32.mrb[0].mxu0
    %v256 = vadd.f32 %v67, %v255
    %v257 = vpop.f32.mrb[0].mxu0
    %v258 = vadd.f32 %v67, %v257
    %259 = vdwg.mxu0
    %v260 = vmax.f32 %v149, 0.0
    %v261 = vmax.f32 %v151, 0.0
    %v262 = vmax.f32 %v238, 0.0
    %v263 = vmax.f32 %v240, 0.0
    %v264 = vmax.f32 %v155, 0.0
    %v265 = vmax.f32 %v157, 0.0
    %v266 = vmax.f32 %v244, 0.0
    %v267 = vmax.f32 %v246, 0.0
    %v268 = vmax.f32 %v161, 0.0
    %v269 = vmax.f32 %v163, 0.0
    %v270 = vmax.f32 %v250, 0.0
    %v271 = vmax.f32 %v252, 0.0
    %v272 = vmax.f32 %v167, 0.0
    %v273 = vmax.f32 %v169, 0.0
    %v274 = vmax.f32 %v256, 0.0
    %v275 = vmax.f32 %v258, 0.0
    %v276 = vmax.f32 %v260, 1e-06
    %v277 = vmax.f32 %v261, 1e-06
    %v278 = vmax.f32 %v264, 1e-06
    %v279 = vmax.f32 %v265, 1e-06
    %v280 = vmax.f32 %v268, 1e-06
    %v281 = vmax.f32 %v269, 1e-06
    %v282 = vmax.f32 %v272, 1e-06
    %v283 = vmax.f32 %v273, 1e-06
    %v284 = vmul.f32 %v276, %v276
    %v285 = vmul.f32 %v277, %v277
    %v286 = vmul.f32 %v278, %v278
    %v287 = vmul.f32 %v279, %v279
    %v288 = vmul.f32 %v280, %v280
    %v289 = vmul.f32 %v281, %v281
    %v290 = vmul.f32 %v282, %v282
    %v291 = vmul.f32 %v283, %v283
    %v292 = vmul.f32 %v284, %v276
    %v293 = vmul.f32 %v285, %v277
    %v294 = vmul.f32 %v286, %v278
    %v295 = vmul.f32 %v287, %v279
    %v296 = vmul.f32 %v288, %v280
    %v297 = vmul.f32 %v289, %v281
    %v298 = vmul.f32 %v290, %v282
    %v299 = vmul.f32 %v291, %v283
    %v300 = vadd.f32 %v292, %v293
    %301 = vadd.xlane.f32.xlu0 %v300
    %v302 = vpop.xlane.xlu0 %301
    %v303 = vadd.f32 %v294, %v295
    %304 = vadd.xlane.f32.xlu0 %v303
    %v305 = vpop.xlane.xlu0 %304
    %v306 = vadd.f32 %v296, %v297
    %307 = vadd.xlane.f32.xlu0 %v306
    %v308 = vpop.xlane.xlu0 %307
    %v309 = vadd.f32 %v298, %v299
    %310 = vadd.xlane.f32.xlu0 %v309
    %v311 = vpop.xlane.xlu0 %310
    %v312 = vrcp.pop 256.0
    %v313 = vmul.f32 %v302, %v312
    %v314 = vmul.f32 %v305, %v312
    %v315 = vmul.f32 %v308, %v312
    %v316 = vmul.f32 %v311, %v312
    %v317 = vpow.f32 %v313, 0.33333334
    %v318 = vpow.f32 %v314, 0.33333334
    %v319 = vpow.f32 %v315, 0.33333334
    %v320 = vpow.f32 %v316, 0.33333334
    %v321 = vld [vmem:[%s3] sm:$0xff]
    %v322 = vld [vmem:[%s3 + $0x8] sm:$0xff]
    %v323 = vld [vmem:[%s3 + $0x10] sm:$0xff]
    %v324 = vld [vmem:[%s3 + $0x18] sm:$0xff]
    %v325 = vld [vmem:[%s4] sm:$0x1]
    %326 = vxpose.xlu0.b32.start [1/16] %v317, 128
    %327 = vxpose.xlu0.b32.cont [2/16] %v318, 128
    %328 = vxpose.xlu0.b32.cont [3/16] %v319, 128
    %329 = vxpose.xlu0.b32.cont [4/16] %v320, 128
    %330 = vxpose.xlu0.b32.cont [5/16] 0.0, 128
    %331 = vxpose.xlu0.b32.cont [6/16] 0.0, 128
    %332 = vxpose.xlu0.b32.cont [7/16] 0.0, 128
    %333 = vxpose.xlu0.b32.cont [8/16] 0.0, 128
    %334 = vxpose.xlu0.b32.cont [9/16] 0.0, 128
    %335 = vxpose.xlu0.b32.cont [10/16] 0.0, 128
    %336 = vxpose.xlu0.b32.cont [11/16] 0.0, 128
    %337 = vxpose.xlu0.b32.cont [12/16] 0.0, 128
    %338 = vxpose.xlu0.b32.cont [13/16] 0.0, 128
    %339 = vxpose.xlu0.b32.cont [14/16] 0.0, 128
    %340 = vxpose.xlu0.b32.cont [15/16] 0.0, 128
    %341 = vxpose.xlu0.b32.end [16/16] 0.0, 128
    %v342 = vpop.trf.xlu0
    %v343 = vpop.trf.xlu0
    %v344 = vpop.trf.xlu0
    %v345 = vpop.trf.xlu0
    %v346 = vpop.trf.xlu0
    %v347 = vpop.trf.xlu0
    %v348 = vpop.trf.xlu0
    %v349 = vpop.trf.xlu0
    %v350 = vpop.trf.xlu0
    %v351 = vpop.trf.xlu0
    %v352 = vpop.trf.xlu0
    %v353 = vpop.trf.xlu0
    %v354 = vpop.trf.xlu0
    %v355 = vpop.trf.xlu0
    %v356 = vpop.trf.xlu0
    %v357 = vpop.trf.xlu0
    %vm358 = vcmask 261120
    %v360 = vsel %vm358, %v342, 0
    %362 = vmatprep.subr.mxu0 0.0
    %363 = vmatpush1.msra.mxu0 %v321
    %364 = vmatprep.subr.mxu0 0.0
    %365 = vmatpush1.msra.mxu0 %v322
    %366 = vmatprep.subr.mxu0 0.0
    %367 = vmatpush1.msra.mxu0 %v323
    %368 = vmatprep.subr.mxu0 0.0
    %369 = vmatpush1.msra.mxu0 %v324
    %370 = vmatprep.subr.mxu0 0.0
    %371 = vmatpush1.msra.mxu0 0.0
    %372 = vmatprep.subr.mxu0 0.0
    %373 = vmatpush1.msra.mxu0 0.0
    %374 = vmatprep.subr.mxu0 0.0
    %375 = vmatpush1.msra.mxu0 0.0
    %376 = vmatprep.subr.mxu0 0.0
    %377 = vmatpush1.msra.mxu0 0.0
    %378 = vmatprep.subr.mxu0 0.0
    %379 = vmatpush1.msra.mxu0 0.0
    %380 = vmatprep.subr.mxu0 0.0
    %381 = vmatpush1.msra.mxu0 0.0
    %382 = vmatprep.subr.mxu0 0.0
    %383 = vmatpush1.msra.mxu0 0.0
    %384 = vmatprep.subr.mxu0 0.0
    %385 = vmatpush1.msra.mxu0 0.0
    %386 = vmatprep.subr.mxu0 0.0
    %387 = vmatpush1.msra.mxu0 0.0
    %388 = vmatprep.subr.mxu0 0.0
    %389 = vmatpush1.msra.mxu0 0.0
    %390 = vmatprep.subr.mxu0 0.0
    %391 = vmatpush1.msra.mxu0 0.0
    %392 = vmatprep.subr.mxu0 0.0
    %393 = vmatpush1.msra.mxu0 0.0
    %394 = vmatprep.subr.mxu0 0.0
    %395 = vmatpush1.msra.mxu0 0.0
    %396 = vmatprep.subr.mxu0 0.0
    %397 = vmatpush1.msra.mxu0 0.0
    %398 = vmatprep.subr.mxu0 0.0
    %399 = vmatpush1.msra.mxu0 0.0
    %400 = vmatprep.subr.mxu0 0.0
    %401 = vmatpush1.msra.mxu0 0.0
    %402 = vmatprep.subr.mxu0 0.0
    %403 = vmatpush1.msra.mxu0 0.0
    %404 = vmatprep.subr.mxu0 0.0
    %405 = vmatpush1.msra.mxu0 0.0
    %406 = vmatprep.subr.mxu0 0.0
    %407 = vmatpush1.msra.mxu0 0.0
    %408 = vmatprep.subr.mxu0 0.0
    %409 = vmatpush1.msra.mxu0 0.0
    %410 = vmatprep.subr.mxu0 0.0
    %411 = vmatpush1.msra.mxu0 0.0
    %412 = vmatprep.subr.mxu0 0.0
    %413 = vmatpush1.msra.mxu0 0.0
    %414 = vmatprep.subr.mxu0 0.0
    %415 = vmatpush1.msra.mxu0 0.0
    %416 = vmatprep.subr.mxu0 0.0
    %417 = vmatpush1.msra.mxu0 0.0
    %418 = vmatprep.subr.mxu0 0.0
    %419 = vmatpush1.msra.mxu0 0.0
    %420 = vmatprep.subr.mxu0 0.0
    %421 = vmatpush1.msra.mxu0 0.0
    %422 = vmatprep.subr.mxu0 0.0
    %423 = vmatpush1.msra.mxu0 0.0
    %424 = vmatprep.subr.mxu0 0.0
    %425 = vmatpush1.msra.mxu0 0.0
    %426 = vmatprep.mubr.f32.mxu0 0.0
    %427 = vmatmul.mubr.f32.gmra.mrb[0].mxu0 %v360
    %v428 = vpop.f32.mrb[0].mxu0
    %v429 = vadd.f32 %v325, %v428
    %v430 = vpop.f32.mrb[0].mxu0
    %431 = vdwg.mxu0
    %v432 = vmax.f32 %v262, 1e-06
    %v433 = vmax.f32 %v263, 1e-06
    %v434 = vmax.f32 %v266, 1e-06
    %v435 = vmax.f32 %v267, 1e-06
    %v436 = vmax.f32 %v270, 1e-06
    %v437 = vmax.f32 %v271, 1e-06
    %v438 = vmax.f32 %v274, 1e-06
    %v439 = vmax.f32 %v275, 1e-06
    %v440 = vmul.f32 %v432, %v432
    %v441 = vmul.f32 %v433, %v433
    %v442 = vmul.f32 %v434, %v434
    %v443 = vmul.f32 %v435, %v435
    %v444 = vmul.f32 %v436, %v436
    %v445 = vmul.f32 %v437, %v437
    %v446 = vmul.f32 %v438, %v438
    %v447 = vmul.f32 %v439, %v439
    %v448 = vmul.f32 %v440, %v432
    %v449 = vmul.f32 %v441, %v433
    %v450 = vmul.f32 %v442, %v434
    %v451 = vmul.f32 %v443, %v435
    %v452 = vmul.f32 %v444, %v436
    %v453 = vmul.f32 %v445, %v437
    %v454 = vmul.f32 %v446, %v438
    %v455 = vmul.f32 %v447, %v439
    %v456 = vadd.f32 %v448, %v449
    %457 = vadd.xlane.f32.xlu0 %v456
    %v458 = vpop.xlane.xlu0 %457
    %v459 = vadd.f32 %v450, %v451
    %460 = vadd.xlane.f32.xlu0 %v459
    %v461 = vpop.xlane.xlu0 %460
    %v462 = vadd.f32 %v452, %v453
    %463 = vadd.xlane.f32.xlu0 %v462
    %v464 = vpop.xlane.xlu0 %463
    %v465 = vadd.f32 %v454, %v455
    %466 = vadd.xlane.f32.xlu0 %v465
    %v467 = vpop.xlane.xlu0 %466
    %v468 = vmul.f32 %v458, %v312
    %v469 = vmul.f32 %v461, %v312
    %v470 = vmul.f32 %v464, %v312
    %v471 = vmul.f32 %v467, %v312
    %v472 = vpow.f32 %v468, 0.33333334
    %v473 = vpow.f32 %v469, 0.33333334
    %v474 = vpow.f32 %v470, 0.33333334
    %v475 = vpow.f32 %v471, 0.33333334
    %s476 = scalar_lea.vmem %s3, 32
    %v477 = vld [vmem:[%s476] sm:$0xff]
    %v478 = vld [vmem:[%s476 + $0x8] sm:$0xff]
    %v479 = vld [vmem:[%s476 + $0x10] sm:$0xff]
    %v480 = vld [vmem:[%s476 + $0x18] sm:$0xff]
    %481 = vxpose.xlu0.b32.start [1/16] %v472, 128
    %482 = vxpose.xlu0.b32.cont [2/16] %v473, 128
    %483 = vxpose.xlu0.b32.cont [3/16] %v474, 128
    %484 = vxpose.xlu0.b32.cont [4/16] %v475, 128
    %485 = vxpose.xlu0.b32.cont [5/16] 0.0, 128
    %486 = vxpose.xlu0.b32.cont [6/16] 0.0, 128
    %487 = vxpose.xlu0.b32.cont [7/16] 0.0, 128
    %488 = vxpose.xlu0.b32.cont [8/16] 0.0, 128
    %489 = vxpose.xlu0.b32.cont [9/16] 0.0, 128
    %490 = vxpose.xlu0.b32.cont [10/16] 0.0, 128
    %491 = vxpose.xlu0.b32.cont [11/16] 0.0, 128
    %492 = vxpose.xlu0.b32.cont [12/16] 0.0, 128
    %493 = vxpose.xlu0.b32.cont [13/16] 0.0, 128
    %494 = vxpose.xlu0.b32.cont [14/16] 0.0, 128
    %495 = vxpose.xlu0.b32.cont [15/16] 0.0, 128
    %496 = vxpose.xlu0.b32.end [16/16] 0.0, 128
    %v497 = vpop.trf.xlu0
    %v498 = vpop.trf.xlu0
    %v499 = vpop.trf.xlu0
    %v500 = vpop.trf.xlu0
    %v501 = vpop.trf.xlu0
    %v502 = vpop.trf.xlu0
    %v503 = vpop.trf.xlu0
    %v504 = vpop.trf.xlu0
    %v505 = vpop.trf.xlu0
    %v506 = vpop.trf.xlu0
    %v507 = vpop.trf.xlu0
    %v508 = vpop.trf.xlu0
    %v509 = vpop.trf.xlu0
    %v510 = vpop.trf.xlu0
    %v511 = vpop.trf.xlu0
    %v512 = vpop.trf.xlu0
    %v514 = vsel %vm358, %v497, 0
    %516 = vmatprep.subr.mxu0 0.0
    %517 = vmatpush1.msra.mxu0 %v477
    %518 = vmatprep.subr.mxu0 0.0
    %519 = vmatpush1.msra.mxu0 %v478
    %520 = vmatprep.subr.mxu0 0.0
    %521 = vmatpush1.msra.mxu0 %v479
    %522 = vmatprep.subr.mxu0 0.0
    %523 = vmatpush1.msra.mxu0 %v480
    %524 = vmatprep.subr.mxu0 0.0
    %525 = vmatpush1.msra.mxu0 0.0
    %526 = vmatprep.subr.mxu0 0.0
    %527 = vmatpush1.msra.mxu0 0.0
    %528 = vmatprep.subr.mxu0 0.0
    %529 = vmatpush1.msra.mxu0 0.0
    %530 = vmatprep.subr.mxu0 0.0
    %531 = vmatpush1.msra.mxu0 0.0
    %532 = vmatprep.subr.mxu0 0.0
    %533 = vmatpush1.msra.mxu0 0.0
    %534 = vmatprep.subr.mxu0 0.0
    %535 = vmatpush1.msra.mxu0 0.0
    %536 = vmatprep.subr.mxu0 0.0
    %537 = vmatpush1.msra.mxu0 0.0
    %538 = vmatprep.subr.mxu0 0.0
    %539 = vmatpush1.msra.mxu0 0.0
    %540 = vmatprep.subr.mxu0 0.0
    %541 = vmatpush1.msra.mxu0 0.0
    %542 = vmatprep.subr.mxu0 0.0
    %543 = vmatpush1.msra.mxu0 0.0
    %544 = vmatprep.subr.mxu0 0.0
    %545 = vmatpush1.msra.mxu0 0.0
    %546 = vmatprep.subr.mxu0 0.0
    %547 = vmatpush1.msra.mxu0 0.0
    %548 = vmatprep.subr.mxu0 0.0
    %549 = vmatpush1.msra.mxu0 0.0
    %550 = vmatprep.subr.mxu0 0.0
    %551 = vmatpush1.msra.mxu0 0.0
    %552 = vmatprep.subr.mxu0 0.0
    %553 = vmatpush1.msra.mxu0 0.0
    %554 = vmatprep.subr.mxu0 0.0
    %555 = vmatpush1.msra.mxu0 0.0
    %556 = vmatprep.subr.mxu0 0.0
    %557 = vmatpush1.msra.mxu0 0.0
    %558 = vmatprep.subr.mxu0 0.0
    %559 = vmatpush1.msra.mxu0 0.0
    %560 = vmatprep.subr.mxu0 0.0
    %561 = vmatpush1.msra.mxu0 0.0
    %562 = vmatprep.subr.mxu0 0.0
    %563 = vmatpush1.msra.mxu0 0.0
    %564 = vmatprep.subr.mxu0 0.0
    %565 = vmatpush1.msra.mxu0 0.0
    %566 = vmatprep.subr.mxu0 0.0
    %567 = vmatpush1.msra.mxu0 0.0
    %568 = vmatprep.subr.mxu0 0.0
    %569 = vmatpush1.msra.mxu0 0.0
    %570 = vmatprep.subr.mxu0 0.0
    %571 = vmatpush1.msra.mxu0 0.0
    %572 = vmatprep.subr.mxu0 0.0
    %573 = vmatpush1.msra.mxu0 0.0
    %574 = vmatprep.subr.mxu0 0.0
    %575 = vmatpush1.msra.mxu0 0.0
    %576 = vmatprep.subr.mxu0 0.0
    %577 = vmatpush1.msra.mxu0 0.0
    %578 = vmatprep.subr.mxu0 0.0
    %579 = vmatpush1.msra.mxu0 0.0
    %580 = vmatprep.mubr.f32.mxu0 0.0
    %581 = vmatmul.mubr.f32.gmra.mrb[0].mxu0 %v514
    %v582 = vpop.f32.mrb[0].mxu0
    %v583 = vadd.f32 %v325, %v582
    %v584 = vpop.f32.mrb[0].mxu0
    %585 = vdwg.mxu0
    %v587 = vrot.slane %v583, 7
    %vm589 = vcmask 1040384
    %v590 = vsel %vm589, %v429, %v587
    %591 = vst [vmem:[#allocation2] sm:$0x3] %v590
    // Predicated region
    $region22: #{custom_model_resnet_forward.1} parent=1 // pred_check
      _
    $region23: #{custom_model_resnet_forward.1} parent=1 // pred_check_branch
      %593 = sbr.rel (0) target = $region25
    $region24: #{custom_model_resnet_forward.1} parent=1 // pred_region
      %s595 = ssub.s32 32, 32
      %596 = vsyncadd [#allocation3], %s595
      %s598 = sshll.u32 [#allocation2], 4
      %s599 = int_to_ptr.vmem [resolvable:$true] %s598
      %601 = dma.vmem_to_hbm [thread:$0]  %s599, 32, %s5, [#allocation3]
    $region25: #{custom_model_resnet_forward.1} parent=1 // pred_fallthru
      _
    // Predicated region
    $region26: #{custom_model_resnet_forward.1} parent=1 // pred_check
      _
    $region27: #{custom_model_resnet_forward.1} parent=1 // pred_check_branch
      %603 = sbr.rel (0) target = $region29
    $region28: #{custom_model_resnet_forward.1} parent=1 // pred_region
      %604 = dma.done [#allocation3], 32
    $region29: #{custom_model_resnet_forward.1} parent=1 // pred_fallthru
      _
    %605 = vsyncpa [#allocation3], 1

</llo_original>
